<compile_context>
chip_gen: v7x
topology: tpu7x:2x2x1
jax: 0.10.0
libtpu: 0.0.40
codegen_flags: <defaults>
</compile_context>

<pallas_src>
import jax
import jax.numpy as jnp
from jax.experimental import pallas as pl
from jax.experimental.pallas import tpu as pltpu


_VMEM_LIMIT_BYTES = 40 * 1024 * 1024   # safe on v5e/v6e (128 MiB) and v7x (64 MiB)
_VMEM_TILE_BUDGET = 24 * 1024 * 1024   # what the tile-size formula may consume


def _round_up(n, m):
    return ((n + m - 1) // m) * m


def _choose_batch_tile(B, D, H, x_bytes, max_block):
    """Batch-tile (lane) width: biggest multiple of 256 that fits the VMEM budget."""
    if B <= 256:
        return _round_up(max(B, 1), 8)           # single small tile (full extent)
    # Per-tile VMEM: double-buffered x columns + h1^T scratch + pred/y buffers,
    # plus the resident W1 double-buffer / bias / w2 row (fixed).
    fixed = 2 * H * D * x_bytes + 4 * H * 4
    per_col = 2 * D * x_bytes + H * 4 + 32
    tb = (_VMEM_TILE_BUDGET - fixed) // per_col
    tb = min(tb, max_block, _round_up(B, 256))
    return max(256, (tb // 256) * 256)


def _make_pred_kernel():
    def kernel(xt_ref, w1_ref, b1_ref, w2_ref, b2_ref, pred_ref):
        # layer 1 on the MXU: (H, D) @ (D, TB) -> (H, TB); bf16 in, f32 acc.
        h1t = jnp.dot(w1_ref[...], xt_ref[...],
                      preferred_element_type=jnp.float32)
        h1t = jnp.maximum(h1t + b1_ref[...], 0.0)
        # layer 2: (1, H) @ (H, TB) -> (1, TB) lane-dense.
        pred = jnp.dot(w2_ref[...], h1t,
                       preferred_element_type=jnp.float32) + b2_ref[0]
        pred_ref[...] = pred.astype(pred_ref.dtype)
    return kernel


def _make_loss_kernel(tile_b):
    def kernel(xt_ref, w1_ref, b1_ref, w2_ref, b2_ref, y_ref, nvalid_ref,
               pred_ref, mae_ref, mse_ref):
        i = pl.program_id(0)
        h1t = jnp.dot(w1_ref[...], xt_ref[...],
                      preferred_element_type=jnp.float32)
        h1t = jnp.maximum(h1t + b1_ref[...], 0.0)
        pred = jnp.dot(w2_ref[...], h1t,
                       preferred_element_type=jnp.float32) + b2_ref[0]
        pred_ref[...] = pred.astype(pred_ref.dtype)

        # Per-tile partial |diff| / diff^2 sums; padded columns masked out.
        diff = pred - y_ref[...]                                   # (1, TB)
        col = i * tile_b + jax.lax.broadcasted_iota(jnp.int32, diff.shape, 1)
        diff = jnp.where(col < nvalid_ref[0], diff, 0.0)
        mae_ref[...] = jnp.broadcast_to(jnp.sum(jnp.abs(diff)), mae_ref.shape)
        mse_ref[...] = jnp.broadcast_to(jnp.sum(diff * diff), mse_ref.shape)
    return kernel


def mlp_regression_forward(x, w1, b1, w2, b2, y=None, *,
                           compute_dtype=jnp.bfloat16, max_block=2048):
    """x: (B, D); w1: (H, D) torch layout; b1: (H,); w2: (1, H); b2: (1,);
    y: optional (B, 1) or (B,). Returns pred (B, 1) or (pred, mae, mse)."""
    x = jnp.asarray(x, jnp.float32)
    B, D = x.shape
    w1 = jnp.asarray(w1)
    H = w1.shape[0]

    x_bytes = jnp.dtype(compute_dtype).itemsize
    tb = _choose_batch_tile(B, D, H, x_bytes, max_block)
    bp = _round_up(B, tb)
    num_tiles = bp // tb

    # Feature-major, compute-dtype x (cast + transpose fuse into one XLA copy);
    # pad the batch (lane) axis up to a whole number of tiles.
    xt = x.T.astype(compute_dtype)
    if bp != B:
        xt = jnp.pad(xt, ((0, 0), (0, bp - B)))

    w1_c = w1.astype(compute_dtype)                           # (H, D) native layout
    b1_col = jnp.asarray(b1, jnp.float32).reshape(H, 1)       # (H, 1)
    w2_row = jnp.asarray(w2, jnp.float32).reshape(1, H)       # (1, H)
    b2_vec = jnp.asarray(b2, jnp.float32).reshape(1)          # SMEM scalar

    xt_spec = pl.BlockSpec((D, tb), lambda i: (0, i))         # batch-tiled x^T
    w1_spec = pl.BlockSpec((H, D), lambda i: (0, 0))          # VMEM-resident
    b1_spec = pl.BlockSpec((H, 1), lambda i: (0, 0))
    w2_spec = pl.BlockSpec((1, H), lambda i: (0, 0))
    smem_spec = pl.BlockSpec(memory_space=pltpu.MemorySpace.SMEM)
    row_spec = pl.BlockSpec((1, tb), lambda i: (0, i))        # lane-dense pred / y

    compiler_params = pltpu.CompilerParams(
        dimension_semantics=("parallel",),   # no cross-tile state -> both v7x TCs usable
        vmem_limit_bytes=_VMEM_LIMIT_BYTES,
    )

    if y is None:
        # Pred-only fast path: no y DMA, no loss math.
        pred_row = pl.pallas_call(
            _make_pred_kernel(),
            out_shape=jax.ShapeDtypeStruct((1, bp), jnp.float32),
            grid=(num_tiles,),
            in_specs=[xt_spec, w1_spec, b1_spec, w2_spec, smem_spec],
            out_specs=row_spec,
            compiler_params=compiler_params,
        )(xt, w1_c, b1_col, w2_row, b2_vec)
        return pred_row[0, :B].reshape(B, 1)

    y_row = jnp.asarray(y, jnp.float32).reshape(1, B)
    if bp != B:
        y_row = jnp.pad(y_row, ((0, 0), (0, bp - B)))
    nvalid = jnp.asarray([B], jnp.int32)

    pred_row, mae_parts, mse_parts = pl.pallas_call(
        _make_loss_kernel(tb),
        out_shape=(
            jax.ShapeDtypeStruct((1, bp), jnp.float32),             # pred (lane-dense)
            jax.ShapeDtypeStruct((num_tiles, 1, 128), jnp.float32),  # per-tile sum|diff|
            jax.ShapeDtypeStruct((num_tiles, 1, 128), jnp.float32),  # per-tile sum diff^2
        ),
        grid=(num_tiles,),
        in_specs=[xt_spec, w1_spec, b1_spec, w2_spec, smem_spec,
                  row_spec,      # y shares the lane-dense (1, tb) layout
                  smem_spec],    # valid-batch count
        out_specs=(
            row_spec,
            pl.BlockSpec((1, 1, 128), lambda i: (i, 0, 0)),
            pl.BlockSpec((1, 1, 128), lambda i: (i, 0, 0)),
        ),
        compiler_params=compiler_params,
    )(xt, w1_c, b1_col, w2_row, b2_vec, y_row, nvalid)

    pred = pred_row[0, :B].reshape(B, 1)
    mae = jnp.sum(mae_parts[:, 0, 0]) / B
    mse = jnp.sum(mse_parts[:, 0, 0]) / B
    return pred, mae, mse


def _reference(x, w1, b1, w2, b2, y=None, compute_dtype=jnp.float32):
    hp = jax.lax.Precision.HIGHEST
    xq = jnp.asarray(x, jnp.float32).astype(compute_dtype)
    w1q = jnp.asarray(w1, jnp.float32).astype(compute_dtype)
    h1 = jnp.dot(xq, w1q.T, preferred_element_type=jnp.float32, precision=hp)
    h1 = jnp.maximum(h1 + jnp.asarray(b1, jnp.float32), 0.0)
    pred = (jnp.dot(h1, jnp.asarray(w2, jnp.float32).T, precision=hp)
            + jnp.asarray(b2, jnp.float32))
    if y is None:
        return pred
    diff = pred - jnp.asarray(y, jnp.float32).reshape(pred.shape)
    return pred, jnp.mean(jnp.abs(diff)), jnp.mean(diff * diff)


if __name__ == "__main__":
    key = jax.random.PRNGKey(0)

    # ---- case 1: module-default small shapes (B=8, input=32, hidden=32) ----
    B, D, H = 8, 32, 32
    kx, kw1, kw2, ky = jax.random.split(key, 4)
    x = jax.random.normal(kx, (B, D), dtype=jnp.float32)
    y = jax.random.normal(ky, (B, 1), dtype=jnp.float32)
    w1 = jax.random.normal(kw1, (H, D), dtype=jnp.float32) * 0.08
    b1 = jnp.zeros((H,), dtype=jnp.float32)
    w2 = jax.random.normal(kw2, (1, H), dtype=jnp.float32) * 0.08
    b2 = jnp.zeros((1,), dtype=jnp.float32)

    pred, mae, mse = jax.block_until_ready(
        mlp_regression_forward(x, w1, b1, w2, b2, y))
    pred_m, mae_m, mse_m = _reference(x, w1, b1, w2, b2, y, compute_dtype=jnp.bfloat16)
    pred_f, _, _ = _reference(x, w1, b1, w2, b2, y, compute_dtype=jnp.float32)
    assert pred.shape == (B, 1)
    assert jnp.allclose(pred, pred_m, atol=2e-3, rtol=2e-3)
    assert jnp.allclose(mae, mae_m, atol=2e-3, rtol=2e-3)
    assert jnp.allclose(mse, mse_m, atol=2e-3, rtol=2e-3)
    assert jnp.allclose(pred, pred_f, atol=3e-2, rtol=3e-2)   # bf16-path sanity vs f32

    # y=None fast path (pred-only kernel, fully parallel).
    pred_only = jax.block_until_ready(mlp_regression_forward(x, w1, b1, w2, b2))
    assert jnp.allclose(pred_only, pred_m, atol=2e-3, rtol=2e-3)

    # ---- case 2: larger shapes -> multi-tile grid (3 tiles of 256), padded /
    # masked last tile, per-tile parallel loss partials. ----
    B2, D2, H2 = 600, 128, 256
    k2 = jax.random.split(jax.random.PRNGKey(1), 6)
    x2 = jax.random.normal(k2[0], (B2, D2), dtype=jnp.float32)
    y2 = jax.random.normal(k2[1], (B2, 1), dtype=jnp.float32)
    w1_2 = jax.random.normal(k2[2], (H2, D2), dtype=jnp.float32) * 0.05
    b1_2 = jax.random.normal(k2[3], (H2,), dtype=jnp.float32) * 0.05
    w2_2 = jax.random.normal(k2[4], (1, H2), dtype=jnp.float32) * 0.05
    b2_2 = jax.random.normal(k2[5], (1,), dtype=jnp.float32) * 0.05

    pred2, mae2, mse2 = jax.block_until_ready(
        mlp_regression_forward(x2, w1_2, b1_2, w2_2, b2_2, y2, max_block=256))
    pred2_m, mae2_m, mse2_m = _reference(x2, w1_2, b1_2, w2_2, b2_2, y2,
                                         compute_dtype=jnp.bfloat16)
    pred2_f, mae2_f, mse2_f = _reference(x2, w1_2, b1_2, w2_2, b2_2, y2,
                                         compute_dtype=jnp.float32)
    assert pred2.shape == (B2, 1)
    assert jnp.allclose(pred2, pred2_m, atol=2e-3, rtol=2e-3)
    assert jnp.allclose(mae2, mae2_m, atol=2e-3, rtol=2e-3)
    assert jnp.allclose(mse2, mse2_m, atol=2e-3, rtol=2e-3)
    assert jnp.allclose(pred2, pred2_f, atol=5e-2, rtol=5e-2)
    assert jnp.allclose(mae2, mae2_f, atol=5e-2, rtol=5e-2)
    assert jnp.allclose(mse2, mse2_f, atol=5e-2, rtol=5e-2)

    print("KERNEL_OK")
</pallas_src>

<mosaic_0001>
module attributes {stable_mosaic.version = 11 : i64} {
  func.func @kernel(%arg0: i32, %arg1: memref<32x8xbf16, #tpu.memory_space<vmem>>, %arg2: memref<32x32xbf16, #tpu.memory_space<vmem>>, %arg3: memref<32x1xf32, #tpu.memory_space<vmem>>, %arg4: memref<1x32xf32, #tpu.memory_space<vmem>>, %arg5: memref<1xf32, #tpu.memory_space<smem>>, %arg6: memref<1x8xf32, #tpu.memory_space<vmem>>, %arg7: memref<1xi32, #tpu.memory_space<smem>>, %arg8: memref<1x8xf32, #tpu.memory_space<vmem>>, %arg9: memref<1x1x128xf32, #tpu.memory_space<vmem>>, %arg10: memref<1x1x128xf32, #tpu.memory_space<vmem>>) attributes {dimension_semantics = [#tpu.dimension_semantics<parallel>], iteration_bounds = array<i64: 1>, scalar_prefetch = 0 : i64, scratch_operands = 0 : i64, tpu.core_type = #tpu.core_type<tc>, window_params = [{transform_indices = @transform_0, window_bounds = array<i64: 32, 8>}, {pipeline_mode = #tpu.pipeline_mode<synchronous>, transform_indices = @transform_1, window_bounds = array<i64: 32, 32>}, {pipeline_mode = #tpu.pipeline_mode<synchronous>, transform_indices = @transform_2, window_bounds = array<i64: 32, 1>}, {pipeline_mode = #tpu.pipeline_mode<synchronous>, transform_indices = @transform_3, window_bounds = array<i64: 1, 32>}, {transform_indices = @transform_4, window_bounds = array<i64: 1>}, {transform_indices = @transform_5, window_bounds = array<i64: 1, 8>}, {transform_indices = @transform_6, window_bounds = array<i64: 1>}, {transform_indices = @transform_7, window_bounds = array<i64: 1, 8>}, {transform_indices = @transform_8, window_bounds = array<i64: 1, 1, 128>}, {transform_indices = @transform_9, window_bounds = array<i64: 1, 1, 128>}]} {
    %c0 = arith.constant 0 : index
    %c0_0 = arith.constant 0 : index
    %0 = vector.load %arg2[%c0, %c0_0] : memref<32x32xbf16, #tpu.memory_space<vmem>>, vector<32x32xbf16>
    %c0_1 = arith.constant 0 : index
    %c0_2 = arith.constant 0 : index
    %1 = vector.load %arg1[%c0_1, %c0_2] : memref<32x8xbf16, #tpu.memory_space<vmem>>, vector<32x8xbf16>
    %cst = arith.constant dense<0.000000e+00> : vector<32x8xf32>
    %2 = tpu.matmul %0, %1, %cst {dimension_numbers = #tpu.dot_dimension_numbers<[1], [0], [0], [1], [0, 0, 1, 1], [], []>} : vector<32x32xbf16>, vector<32x8xbf16>, vector<32x8xf32> -> vector<32x8xf32>
    %c0_3 = arith.constant 0 : index
    %c0_4 = arith.constant 0 : index
    %3 = vector.load %arg3[%c0_3, %c0_4] : memref<32x1xf32, #tpu.memory_space<vmem>>, vector<32x1xf32>
    %4 = vector.broadcast %3 : vector<32x1xf32> to vector<32x8xf32>
    %5 = arith.addf %2, %4 : vector<32x8xf32>
    %cst_5 = arith.constant 0.000000e+00 : f32
    %6 = vector.broadcast %cst_5 : f32 to vector<32x8xf32>
    %7 = arith.maximumf %5, %6 : vector<32x8xf32>
    %c0_6 = arith.constant 0 : index
    %c0_7 = arith.constant 0 : index
    %8 = vector.load %arg4[%c0_6, %c0_7] : memref<1x32xf32, #tpu.memory_space<vmem>>, vector<1x32xf32>
    %cst_8 = arith.constant dense<0.000000e+00> : vector<1x8xf32>
    %9 = tpu.matmul %8, %7, %cst_8 {dimension_numbers = #tpu.dot_dimension_numbers<[1], [0], [0], [1], [0, 0, 1, 1], [], []>} : vector<1x32xf32>, vector<32x8xf32>, vector<1x8xf32> -> vector<1x8xf32>
    %c0_9 = arith.constant 0 : index
    %10 = memref.load %arg5[%c0_9] : memref<1xf32, #tpu.memory_space<smem>>
    %11 = vector.broadcast %10 : f32 to vector<1x8xf32>
    %12 = arith.addf %9, %11 : vector<1x8xf32>
    %c0_10 = arith.constant 0 : index
    %c0_11 = arith.constant 0 : index
    %13 = vector.load %arg8[%c0_10, %c0_11] : memref<1x8xf32, #tpu.memory_space<vmem>>, vector<1x8xf32>
    tpu.vector_store %arg8[%c0_10, %c0_11], %12 {strides = array<i32>} : memref<1x8xf32, #tpu.memory_space<vmem>>, vector<1x8xf32>,
    %c0_12 = arith.constant 0 : index
    %c0_13 = arith.constant 0 : index
    %14 = vector.load %arg6[%c0_12, %c0_13] : memref<1x8xf32, #tpu.memory_space<vmem>>, vector<1x8xf32>
    %15 = arith.subf %12, %14 : vector<1x8xf32>
    %c8_i32 = arith.constant 8 : i32
    %16 = arith.muli %arg0, %c8_i32 : i32
    %17 = tpu.iota {dimensions = array<i32: 1>} : vector<1x8xi32>
    %18 = vector.broadcast %16 : i32 to vector<1x8xi32>
    %19 = arith.addi %18, %17 : vector<1x8xi32>
    %c0_14 = arith.constant 0 : index
    %20 = memref.load %arg7[%c0_14] : memref<1xi32, #tpu.memory_space<smem>>
    %21 = vector.broadcast %20 : i32 to vector<1x8xi32>
    %22 = arith.cmpi slt, %19, %21 : vector<1x8xi32>
    %cst_15 = arith.constant 0.000000e+00 : f32
    %23 = vector.broadcast %cst_15 : f32 to vector<1x8xf32>
    %24 = arith.select %22, %15, %23 : vector<1x8xi1>, vector<1x8xf32>
    %25 = math.absf %24 : vector<1x8xf32>
    %26 = vector.shape_cast %25 : vector<1x8xf32> to vector<1x1x8xf32>
    %cst_16 = arith.constant dense<0.000000e+00> : vector<1xf32>
    %27 = vector.multi_reduction <add>, %26, %cst_16 [1, 2] : vector<1x1x8xf32> to vector<1xf32>
    %28 = vector.shape_cast %27 : vector<1xf32> to vector<1x1x1xf32>
    %29 = vector.extract %28[0, 0, 0] : f32 from vector<1x1x1xf32>
    %30 = vector.broadcast %29 : f32 to vector<1x1x128xf32>
    %c0_17 = arith.constant 0 : index
    %c0_18 = arith.constant 0 : index
    %c0_19 = arith.constant 0 : index
    %31 = vector.load %arg9[%c0_17, %c0_18, %c0_19] : memref<1x1x128xf32, #tpu.memory_space<vmem>>, vector<1x1x128xf32>
    tpu.vector_store %arg9[%c0_17, %c0_18, %c0_19], %30 {strides = array<i32>} : memref<1x1x128xf32, #tpu.memory_space<vmem>>, vector<1x1x128xf32>,
    %32 = arith.mulf %24, %24 : vector<1x8xf32>
    %33 = vector.shape_cast %32 : vector<1x8xf32> to vector<1x1x8xf32>
    %cst_20 = arith.constant dense<0.000000e+00> : vector<1xf32>
    %34 = vector.multi_reduction <add>, %33, %cst_20 [1, 2] : vector<1x1x8xf32> to vector<1xf32>
    %35 = vector.shape_cast %34 : vector<1xf32> to vector<1x1x1xf32>
    %36 = vector.extract %35[0, 0, 0] : f32 from vector<1x1x1xf32>
    %37 = vector.broadcast %36 : f32 to vector<1x1x128xf32>
    %c0_21 = arith.constant 0 : index
    %c0_22 = arith.constant 0 : index
    %c0_23 = arith.constant 0 : index
    %38 = vector.load %arg10[%c0_21, %c0_22, %c0_23] : memref<1x1x128xf32, #tpu.memory_space<vmem>>, vector<1x1x128xf32>
    tpu.vector_store %arg10[%c0_21, %c0_22, %c0_23], %37 {strides = array<i32>} : memref<1x1x128xf32, #tpu.memory_space<vmem>>, vector<1x1x128xf32>,
    return
  }
  func.func @transform_0(%arg0: i32) -> (i32, i32) {
    %c0_i32 = arith.constant 0 : i32
    %c0_i32_0 = arith.constant 0 : i32
    return %c0_i32, %arg0 : i32, i32
  }
  func.func @transform_1(%arg0: i32) -> (i32, i32) {
    %c0_i32 = arith.constant 0 : i32
    %c0_i32_0 = arith.constant 0 : i32
    %c0_i32_1 = arith.constant 0 : i32
    return %c0_i32, %c0_i32_0 : i32, i32
  }
  func.func @transform_2(%arg0: i32) -> (i32, i32) {
    %c0_i32 = arith.constant 0 : i32
    %c0_i32_0 = arith.constant 0 : i32
    %c0_i32_1 = arith.constant 0 : i32
    return %c0_i32, %c0_i32_0 : i32, i32
  }
  func.func @transform_3(%arg0: i32) -> (i32, i32) {
    %c0_i32 = arith.constant 0 : i32
    %c0_i32_0 = arith.constant 0 : i32
    %c0_i32_1 = arith.constant 0 : i32
    return %c0_i32, %c0_i32_0 : i32, i32
  }
  func.func @transform_4(%arg0: i32) -> i32 {
    %c0_i32 = arith.constant 0 : i32
    %c0_i32_0 = arith.constant 0 : i32
    return %c0_i32 : i32
  }
  func.func @transform_5(%arg0: i32) -> (i32, i32) {
    %c0_i32 = arith.constant 0 : i32
    %c0_i32_0 = arith.constant 0 : i32
    return %c0_i32, %arg0 : i32, i32
  }
  func.func @transform_6(%arg0: i32) -> i32 {
    %c0_i32 = arith.constant 0 : i32
    %c0_i32_0 = arith.constant 0 : i32
    return %c0_i32 : i32
  }
  func.func @transform_7(%arg0: i32) -> (i32, i32) {
    %c0_i32 = arith.constant 0 : i32
    %c0_i32_0 = arith.constant 0 : i32
    return %c0_i32, %arg0 : i32, i32
  }
  func.func @transform_8(%arg0: i32) -> (i32, i32, i32) {
    %c0_i32 = arith.constant 0 : i32
    %c0_i32_0 = arith.constant 0 : i32
    %c0_i32_1 = arith.constant 0 : i32
    return %arg0, %c0_i32, %c0_i32_0 : i32, i32, i32
  }
  func.func @transform_9(%arg0: i32) -> (i32, i32, i32) {
    %c0_i32 = arith.constant 0 : i32
    %c0_i32_0 = arith.constant 0 : i32
    %c0_i32_1 = arith.constant 0 : i32
    return %arg0, %c0_i32, %c0_i32_0 : i32, i32, i32
  }
}

</mosaic_0001>

<llo_original>
// kernel: tpu_custom_call.1
$region0: #{tpu_custom_call.1}
  #allocation0 [shape = 'u32[]', space=smem, size = 0x4, offset = 0x4, fixed_abs, tag = 'smem constant byte address 0x4 - core index']
  #allocation1 [shape = 'u32[144,128]{1,0:T(1,128)}', space=vmem, size = 0x12000, scoped, tag = 'internal scratch']
  #allocation2 [shape = 'f32[1]{0:T(128)S(6)}', space=smem, size = 0x200, scoped, tag = 'scoped memory for tpu_custom_call.1']
  #allocation3 [shape = 's32[1]{0:T(128)S(6)}', space=smem, size = 0x200, scoped, tag = 'scoped memory for tpu_custom_call.1']
  %s0 = inlined_call_operand.vmem [shape: bf16[32,8], index: 0, kind: input, shape index: {}]
  %s1 = inlined_call_operand.vmem [shape: bf16[32,32], index: 1, kind: input, shape index: {}]
  %s2 = inlined_call_operand.vmem [shape: f32[32,1], index: 2, kind: input, shape index: {}]
  %s3 = inlined_call_operand.vmem [shape: f32[1,32], index: 3, kind: input, shape index: {}]
  %s4 = inlined_call_operand.<no memory space> [shape: f32[1], index: 4, kind: input, shape index: {}]
  %s5 = inlined_call_operand.vmem [shape: f32[1,8], index: 5, kind: input, shape index: {}]
  %s6 = inlined_call_operand.<no memory space> [shape: s32[1], index: 6, kind: input, shape index: {}]
  %s7 = inlined_call_operand.hbm [shape: f32[1,8], index: 7, kind: output, shape index: {0}]
  %s8 = inlined_call_operand.hbm [shape: f32[1,1,128], index: 8, kind: output, shape index: {1}]
  %s9 = inlined_call_operand.hbm [shape: f32[1,1,128], index: 9, kind: output, shape index: {2}]
  %10 = xla_tuple %s7, %s8, %s9
  %s11 = sld [smem:[#allocation0]]
  $region54: #{tpu_custom_call.1} parent=0
    _
  %s13 = ssub.s32 1, %s11
  %s14 = scalar_select 0, %s13, %s11
  %15 = sst [smem:[#allocation2]] %s4
  %16 = sst [smem:[#allocation3]] %s6
  $region1: #{tpu_custom_call.1} parent=0
    #allocation4 [shape = 'u8[512]{0}', space=vmem, size = 0x400, scoped, tag = 'output window, operand 0, single buffered']
    #allocation5 [shape = 's32[1]{0}', space=sflag, size = 0x4, scoped, tag = 'scoped memory for tpu_custom_call.1']
    #allocation6 [shape = 'u8[512]{0}', space=vmem, size = 0x400, scoped, tag = 'output window, operand 1, single buffered']
    #allocation7 [shape = 's32[1]{0}', space=sflag, size = 0x4, scoped, tag = 'scoped memory for tpu_custom_call.1']
    #allocation8 [shape = 'u8[512]{0}', space=vmem, size = 0x400, scoped, tag = 'output window, operand 2, single buffered']
    %17 = vsyncpa [#allocation5], 0
    %18 = vsyncpa [#allocation7], 0
    // Predicated region
    $region2: #{tpu_custom_call.1} parent=1 // pred_check
      _
    $region3: #{tpu_custom_call.1} parent=1 // pred_check_branch
      %20 = sbr.rel (0) target = $region5
    $region4: #{tpu_custom_call.1} parent=1 // pred_region
      _
    $region5: #{tpu_custom_call.1} parent=1 // pred_fallthru
      _
    // Predicated region
    $region6: #{tpu_custom_call.1} parent=1 // pred_check
      _
    $region7: #{tpu_custom_call.1} parent=1 // pred_check_branch
      %22 = sbr.rel (0) target = $region9
    $region8: #{tpu_custom_call.1} parent=1 // pred_region
      _
    $region9: #{tpu_custom_call.1} parent=1 // pred_fallthru
      _
    // Predicated region
    $region10: #{tpu_custom_call.1} parent=1 // pred_check
      _
    $region11: #{tpu_custom_call.1} parent=1 // pred_check_branch
      %24 = sbr.rel (0) target = $region13
    $region12: #{tpu_custom_call.1} parent=1 // pred_region
      _
    $region13: #{tpu_custom_call.1} parent=1 // pred_fallthru
      _
    // Predicated region
    $region14: #{tpu_custom_call.1} parent=1 // pred_check
      _
    $region15: #{tpu_custom_call.1} parent=1 // pred_check_branch
      %26 = sbr.rel (0) target = $region17
    $region16: #{tpu_custom_call.1} parent=1 // pred_region
      _
    $region17: #{tpu_custom_call.1} parent=1 // pred_fallthru
      _
    // Predicated region
    $region18: #{tpu_custom_call.1} parent=1 // pred_check
      _
    $region19: #{tpu_custom_call.1} parent=1 // pred_check_branch
      %28 = sbr.rel (0) target = $region21
    $region20: #{tpu_custom_call.1} parent=1 // pred_region
      _
    $region21: #{tpu_custom_call.1} parent=1 // pred_fallthru
      _
    // Predicated region
    $region22: #{tpu_custom_call.1} parent=1 // pred_check
      _
    $region23: #{tpu_custom_call.1} parent=1 // pred_check_branch
      %30 = sbr.rel (0) target = $region25
    $region24: #{tpu_custom_call.1} parent=1 // pred_region
      _
    $region25: #{tpu_custom_call.1} parent=1 // pred_fallthru
      _
    // Predicated region
    $region26: #{tpu_custom_call.1} parent=1 // pred_check
      _
    $region27: #{tpu_custom_call.1} parent=1 // pred_check_branch
      %32 = sbr.rel (0) target = $region29
    $region28: #{tpu_custom_call.1} parent=1 // pred_region
      _
    $region29: #{tpu_custom_call.1} parent=1 // pred_fallthru
      _
    %v34 = vld [vmem:[%s1] sm:$0xf]
    %v35 = vld [vmem:[%s1 + $0x4] sm:$0xf]
    %v36 = vld [vmem:[%s1 + $0x8] sm:$0xf]
    %v37 = vld [vmem:[%s1 + $0xc] sm:$0xf]
    %v38 = vld [vmem:[%s0] sm:$0xf]
    %v39 = vld [vmem:[%s0 + $0x4] sm:$0xf]
    %v40 = vld [vmem:[%s0 + $0x8] sm:$0xf]
    %v41 = vld [vmem:[%s0 + $0xc] sm:$0xf]
    %v42 = vld [vmem:[%s2] sm:$0xff]
    %v43 = vld [vmem:[%s2 + $0x8] sm:$0xff]
    %v44 = vld [vmem:[%s2 + $0x10] sm:$0xff]
    %v45 = vld [vmem:[%s2 + $0x18] sm:$0xff]
    %47 = vset.pattern.permute.xlu0 0
    %48 = vperm.xlu0 %47, %v42
    %v49 = vpop.permute.xlu0 %48
    %52 = vset.pattern.permute.xlu0 0
    %53 = vperm.xlu0 %52, %v43
    %v54 = vpop.permute.xlu0 %53
    %57 = vset.pattern.permute.xlu0 0
    %58 = vperm.xlu0 %57, %v44
    %v59 = vpop.permute.xlu0 %58
    %62 = vset.pattern.permute.xlu0 0
    %63 = vperm.xlu0 %62, %v45
    %v64 = vpop.permute.xlu0 %63
    %v70 = vunpack.c.l.b16 %v34
    %v71 = vunpack.c.l.b16 %v35
    %v72 = vunpack.c.l.b16 %v36
    %v73 = vunpack.c.l.b16 %v37
    %v74 = vpack.c.b16 %v71, %v70
    %v75 = vpack.c.b16 %v73, %v72
    %v80 = vunpack.c.l.b16 %v38
    %v81 = vunpack.c.l.b16 %v39
    %v82 = vunpack.c.l.b16 %v40
    %v83 = vunpack.c.l.b16 %v41
    %v84 = vpack.c.b16 %v81, %v80
    %v85 = vpack.c.b16 %v83, %v82
    %vm88 = vcmask 261120
    %v90 = vsel %vm88, %v74, 0
    %v93 = vsel %vm88, %v75, 0
    %95 = vmatprep.subr.bf16.mxu0 0
    %96 = vmatpush1.bf16.msra.mxu0 %v84
    %97 = vmatprep.subr.bf16.mxu0 0
    %98 = vmatpush1.bf16.msra.mxu0 %v85
    %99 = vmatprep.subr.bf16.mxu0 0
    %100 = vmatpush1.bf16.msra.mxu0 0
    %101 = vmatprep.subr.bf16.mxu0 0
    %102 = vmatpush1.bf16.msra.mxu0 0
    %103 = vmatprep.subr.bf16.mxu0 0
    %104 = vmatpush1.bf16.msra.mxu0 0
    %105 = vmatprep.subr.bf16.mxu0 0
    %106 = vmatpush1.bf16.msra.mxu0 0
    %107 = vmatprep.subr.bf16.mxu0 0
    %108 = vmatpush1.bf16.msra.mxu0 0
    %109 = vmatprep.subr.bf16.mxu0 0
    %110 = vmatpush1.bf16.msra.mxu0 0
    %111 = vmatprep.subr.bf16.mxu0 0
    %112 = vmatpush1.bf16.msra.mxu0 0
    %113 = vmatprep.subr.bf16.mxu0 0
    %114 = vmatpush1.bf16.msra.mxu0 0
    %115 = vmatprep.subr.bf16.mxu0 0
    %116 = vmatpush1.bf16.msra.mxu0 0
    %117 = vmatprep.subr.bf16.mxu0 0
    %118 = vmatpush1.bf16.msra.mxu0 0
    %119 = vmatprep.subr.bf16.mxu0 0
    %120 = vmatpush1.bf16.msra.mxu0 0
    %121 = vmatprep.subr.bf16.mxu0 0
    %122 = vmatpush1.bf16.msra.mxu0 0
    %123 = vmatprep.subr.bf16.mxu0 0
    %124 = vmatpush1.bf16.msra.mxu0 0
    %125 = vmatprep.subr.bf16.mxu0 0
    %126 = vmatpush1.bf16.msra.mxu0 0
    %127 = vmatprep.mubr.bf16.mxu0 0
    %128 = vmatmul.mubr.bf16.gmra.mrb[0].mxu0 %v90
    %v129 = vpop.f32.mrb[0].mxu0
    %v130 = vadd.f32 %v49, %v129
    %v131 = vpop.f32.mrb[0].mxu0
    %v132 = vpop.f32.mrb[0].mxu0
    %v133 = vadd.f32 %v54, %v132
    %v134 = vpop.f32.mrb[0].mxu0
    %135 = vmatprep.mubr.bf16.mxu0 0
    %136 = vmatmul.mubr.bf16.gmra.mrb[0].mxu0 %v93
    %v137 = vpop.f32.mrb[0].mxu0
    %v138 = vadd.f32 %v59, %v137
    %v139 = vpop.f32.mrb[0].mxu0
    %v140 = vpop.f32.mrb[0].mxu0
    %v141 = vadd.f32 %v64, %v140
    %v142 = vpop.f32.mrb[0].mxu0
    %143 = vdwg.mxu0
    %v144 = vmax.f32 %v130, 0.0
    %v145 = vmax.f32 %v133, 0.0
    %v146 = vmax.f32 %v138, 0.0
    %v147 = vmax.f32 %v141, 0.0
    %v148 = vld [vmem:[%s3] sm:$0x1]
    %s149 = sld [smem:[#allocation2]]
    %v150 = vstv %s149
    %v152 = vsel %vm88, %v148, 0
    %154 = vmatprep.subr.mxu0 0.0
    %155 = vmatpush1.msra.mxu0 %v144
    %156 = vmatprep.subr.mxu0 0.0
    %157 = vmatpush1.msra.mxu0 %v145
    %158 = vmatprep.subr.mxu0 0.0
    %159 = vmatpush1.msra.mxu0 %v146
    %160 = vmatprep.subr.mxu0 0.0
    %161 = vmatpush1.msra.mxu0 %v147
    %162 = vmatprep.subr.mxu0 0.0
    %163 = vmatpush1.msra.mxu0 0.0
    %164 = vmatprep.subr.mxu0 0.0
    %165 = vmatpush1.msra.mxu0 0.0
    %166 = vmatprep.subr.mxu0 0.0
    %167 = vmatpush1.msra.mxu0 0.0
    %168 = vmatprep.subr.mxu0 0.0
    %169 = vmatpush1.msra.mxu0 0.0
    %170 = vmatprep.subr.mxu0 0.0
    %171 = vmatpush1.msra.mxu0 0.0
    %172 = vmatprep.subr.mxu0 0.0
    %173 = vmatpush1.msra.mxu0 0.0
    %174 = vmatprep.subr.mxu0 0.0
    %175 = vmatpush1.msra.mxu0 0.0
    %176 = vmatprep.subr.mxu0 0.0
    %177 = vmatpush1.msra.mxu0 0.0
    %178 = vmatprep.subr.mxu0 0.0
    %179 = vmatpush1.msra.mxu0 0.0
    %180 = vmatprep.subr.mxu0 0.0
    %181 = vmatpush1.msra.mxu0 0.0
    %182 = vmatprep.subr.mxu0 0.0
    %183 = vmatpush1.msra.mxu0 0.0
    %184 = vmatprep.subr.mxu0 0.0
    %185 = vmatpush1.msra.mxu0 0.0
    %186 = vmatprep.subr.mxu0 0.0
    %187 = vmatpush1.msra.mxu0 0.0
    %188 = vmatprep.subr.mxu0 0.0
    %189 = vmatpush1.msra.mxu0 0.0
    %190 = vmatprep.subr.mxu0 0.0
    %191 = vmatpush1.msra.mxu0 0.0
    %192 = vmatprep.subr.mxu0 0.0
    %193 = vmatpush1.msra.mxu0 0.0
    %194 = vmatprep.subr.mxu0 0.0
    %195 = vmatpush1.msra.mxu0 0.0
    %196 = vmatprep.subr.mxu0 0.0
    %197 = vmatpush1.msra.mxu0 0.0
    %198 = vmatprep.subr.mxu0 0.0
    %199 = vmatpush1.msra.mxu0 0.0
    %200 = vmatprep.subr.mxu0 0.0
    %201 = vmatpush1.msra.mxu0 0.0
    %202 = vmatprep.subr.mxu0 0.0
    %203 = vmatpush1.msra.mxu0 0.0
    %204 = vmatprep.subr.mxu0 0.0
    %205 = vmatpush1.msra.mxu0 0.0
    %206 = vmatprep.subr.mxu0 0.0
    %207 = vmatpush1.msra.mxu0 0.0
    %208 = vmatprep.subr.mxu0 0.0
    %209 = vmatpush1.msra.mxu0 0.0
    %210 = vmatprep.subr.mxu0 0.0
    %211 = vmatpush1.msra.mxu0 0.0
    %212 = vmatprep.subr.mxu0 0.0
    %213 = vmatpush1.msra.mxu0 0.0
    %214 = vmatprep.subr.mxu0 0.0
    %215 = vmatpush1.msra.mxu0 0.0
    %216 = vmatprep.subr.mxu0 0.0
    %217 = vmatpush1.msra.mxu0 0.0
    %218 = vmatprep.mubr.f32.mxu0 0.0
    %219 = vmatmul.mubr.f32.gmra.mrb[0].mxu0 %v152
    %v220 = vpop.f32.mrb[0].mxu0
    %v221 = vadd.f32 %v150, %v220
    %v222 = vpop.f32.mrb[0].mxu0
    %223 = vdwg.mxu0
    %vm224 = vcmask 57344
    %225 = vst.msk [vmem:[#allocation4] sm:$0x1] %vm224, %v221
    %v226 = vld [vmem:[%s5] sm:$0x1]
    %v227 = vsub.f32 %v221, %v226
    %s228 = smul.u32 0, 8
    %v229 = vlaneseq
    %v230 = vand.u32 %v229, 127
    %v231 = vstv %s228
    %v232 = vadd.s32 %v231, %v230
    %s233 = sld [smem:[#allocation3]]
    %v234 = vstv %s233
    %vm235 = vcmp.lt.s32.totalorder %v232, %v234
    %v236 = vsel %vm235, %v227, 0.0
    %v237 = vand.u32 2147483647, %v236
    %v238 = vsel %vm224, %v237, 0.0
    %239 = vadd.xlane.f32.xlu0 %v238
    %v240 = vpop.xlane.xlu0 %239
    %v241 = vrot.slane %v240, 4
    %v242 = vadd.f32 %v240, %v241
    %v243 = vrot.slane %v242, 2
    %v244 = vadd.f32 %v242, %v243
    %v245 = vrot.slane %v244, 1
    %v246 = vadd.f32 %v244, %v245
    %s247 = vtos %v246
    %v248 = vstv %s247
    %249 = vst [vmem:[#allocation6] sm:$0x1] %v248
    %v250 = vmul.f32 %v236, %v236
    %v251 = vsel %vm224, %v250, 0.0
    %252 = vadd.xlane.f32.xlu0 %v251
    %v253 = vpop.xlane.xlu0 %252
    %v254 = vrot.slane %v253, 4
    %v255 = vadd.f32 %v253, %v254
    %v256 = vrot.slane %v255, 2
    %v257 = vadd.f32 %v255, %v256
    %v258 = vrot.slane %v257, 1
    %v259 = vadd.f32 %v257, %v258
    %s260 = vtos %v259
    %v261 = vstv %s260
    %262 = vst [vmem:[#allocation8] sm:$0x1] %v261
    // Predicated region
    $region30: #{tpu_custom_call.1} parent=1 // pred_check
      _
    $region31: #{tpu_custom_call.1} parent=1 // pred_check_branch
      %264 = sbr.rel (0) target = $region33
    $region32: #{tpu_custom_call.1} parent=1 // pred_region
      %s266 = ssub.s32 16, 16
      %267 = vsyncadd [#allocation5], %s266
      %s269 = sshll.u32 [#allocation4], 4
      %s270 = int_to_ptr.vmem [resolvable:$true] %s269
      %272 = dma.vmem_to_hbm [thread:$0]  %s270, 16, %s7, [#allocation5]
    $region33: #{tpu_custom_call.1} parent=1 // pred_fallthru
      _
    // Predicated region
    $region34: #{tpu_custom_call.1} parent=1 // pred_check
      _
    $region35: #{tpu_custom_call.1} parent=1 // pred_check_branch
      %274 = sbr.rel (0) target = $region37
    $region36: #{tpu_custom_call.1} parent=1 // pred_region
      %s276 = ssub.s32 16, 16
      %277 = vsyncadd [#allocation7], %s276
      %s279 = sshll.u32 [#allocation6], 4
      %s280 = int_to_ptr.vmem [resolvable:$true] %s279
      %282 = dma.vmem_to_hbm [thread:$0]  %s280, 16, %s8, [#allocation7]
    $region37: #{tpu_custom_call.1} parent=1 // pred_fallthru
      _
    // Predicated region
    $region38: #{tpu_custom_call.1} parent=1 // pred_check
      _
    $region39: #{tpu_custom_call.1} parent=1 // pred_check_branch
      %284 = sbr.rel (0) target = $region41
    $region40: #{tpu_custom_call.1} parent=1 // pred_region
      %s286 = ssub.s32 16, 16
      %287 = vsyncadd [#allocation7], %s286
      %s289 = sshll.u32 [#allocation8], 4
      %s290 = int_to_ptr.vmem [resolvable:$true] %s289
      %292 = dma.vmem_to_hbm [thread:$0]  %s290, 16, %s9, [#allocation7]
    $region41: #{tpu_custom_call.1} parent=1 // pred_fallthru
      _
    // Predicated region
    $region42: #{tpu_custom_call.1} parent=1 // pred_check
      _
    $region43: #{tpu_custom_call.1} parent=1 // pred_check_branch
      %294 = sbr.rel (0) target = $region45
    $region44: #{tpu_custom_call.1} parent=1 // pred_region
      %295 = dma.done [#allocation5], 16
    $region45: #{tpu_custom_call.1} parent=1 // pred_fallthru
      _
    // Predicated region
    $region46: #{tpu_custom_call.1} parent=1 // pred_check
      _
    $region47: #{tpu_custom_call.1} parent=1 // pred_check_branch
      %297 = sbr.rel (0) target = $region49
    $region48: #{tpu_custom_call.1} parent=1 // pred_region
      %298 = dma.done [#allocation7], 16
    $region49: #{tpu_custom_call.1} parent=1 // pred_fallthru
      _
    // Predicated region
    $region50: #{tpu_custom_call.1} parent=1 // pred_check
      _
    $region51: #{tpu_custom_call.1} parent=1 // pred_check_branch
      %300 = sbr.rel (0) target = $region53
    $region52: #{tpu_custom_call.1} parent=1 // pred_region
      %301 = dma.done [#allocation7], 16
    $region53: #{tpu_custom_call.1} parent=1 // pred_fallthru
      _
    %302 = vsyncpa [#allocation5], 1
    %303 = vsyncpa [#allocation7], 1

</llo_original>
